<compile_context>
chip_gen: v6e
topology: v6e:2x2x1
jax: 0.10.0
libtpu: 0.0.40
codegen_flags: <defaults>
</compile_context>

<pallas_src>
import functools

import jax
import jax.numpy as jnp
from jax.experimental import pallas as pl
from jax.experimental.pallas import tpu as pltpu


def translator_kernel(b_tile, s, s_txt,
                      x_ref, fsw_ref, fsb_ref, ssw_ref, ssb_ref, out_ref):
    # x_ref:   (b_tile*S, D)        -- batch folded into M
    # fsw_ref: (D, D_pad)           fsb_ref: (1, D_pad)   (f32)
    # ssw_ref: (S_txt, S)           ssb_ref: (S_txt, 1)   (f32)
    # out_ref: (b_tile*S_txt, D_pad) f32, lane-dense (D_pad % 128 == 0)

    # Stage 1: single MXU matmul over the whole batch slab; bias + ReLU in f32.
    h = jnp.dot(x_ref[...], fsw_ref[...], preferred_element_type=jnp.float32)
    h = jnp.maximum(h + fsb_ref[...], 0.0)           # (b_tile*S, D_pad) f32
    h = h.astype(ssw_ref.dtype)                      # back to MXU operand dtype

    # Stage 2: contraction over the token axis. ss_w is already (S_txt, S)
    # (PyTorch layout), so W2 @ h_b writes the output directly in
    # (S_txt, D_pad) orientation -- no XLU transposes anywhere.
    w2 = ssw_ref[...]
    b2 = ssb_ref[...]
    for b in range(b_tile):                          # static unroll, b_tile is small
        hb = h[b * s:(b + 1) * s, :]                 # (S, D_pad)
        ob = jnp.dot(w2, hb, preferred_element_type=jnp.float32) + b2
        out_ref[b * s_txt:(b + 1) * s_txt, :] = ob.astype(out_ref.dtype)


def translator_forward(x, fs_w, fs_b, ss_w, ss_b, *, b_tile=None):
    """x: (B, S, D). fs_w: (D, D_txt) (= first_stage.weight.T), fs_b: (D_txt,).
    ss_w: (S_txt, S) (= second_stage.weight, torch layout), ss_b: (S_txt,).
    Returns (B, S_txt, D_txt) in float32."""
    B, S, D = x.shape
    D_txt = fs_w.shape[1]
    S_txt = ss_w.shape[0]
    assert fs_w.shape == (D, D_txt) and ss_w.shape == (S_txt, S)

    # Lane-dense output: pad text channels up to a multiple of 128.
    D_pad = ((D_txt + 127) // 128) * 128
    if D_pad != D_txt:
        fs_w = jnp.pad(fs_w, ((0, 0), (0, D_pad - D_txt)))
        fs_b = jnp.pad(fs_b, (0, D_pad - D_txt))

    # Batch tiling: amortize per-grid-step overhead while keeping >=2 parallel
    # steps (both v7x TensorCores busy) when B >= 2.
    if b_tile is None:
        b_tile = max(1, B // 2)
    # (8,128) block constraint on the sublane dims; fall back to one full block.
    if (b_tile * S) % 8 or (b_tile * S_txt) % 8:
        b_tile = B
    B_pad = ((B + b_tile - 1) // b_tile) * b_tile
    if B_pad != B:
        x = jnp.pad(x, ((0, B_pad - B), (0, 0), (0, 0)))

    x2 = x.reshape(B_pad * S, D)                     # free (contiguous) reshape
    fs_b2 = fs_b.reshape(1, D_pad).astype(jnp.float32)
    ss_b2 = ss_b.reshape(S_txt, 1).astype(jnp.float32)

    kernel = functools.partial(translator_kernel, b_tile, S, S_txt)
    grid = (B_pad // b_tile,)

    out2 = pl.pallas_call(
        kernel,
        out_shape=jax.ShapeDtypeStruct((B_pad * S_txt, D_pad), jnp.float32),
        grid_spec=pltpu.PrefetchScalarGridSpec(
            num_scalar_prefetch=0,
            grid=grid,
            in_specs=[
                pl.BlockSpec((b_tile * S, D), lambda i: (i, 0)),   # activations
                # weights/biases: constant index_map -> resident across steps.
                pl.BlockSpec((D, D_pad), lambda i: (0, 0)),
                pl.BlockSpec((1, D_pad), lambda i: (0, 0)),
                pl.BlockSpec((S_txt, S), lambda i: (0, 0)),
                pl.BlockSpec((S_txt, 1), lambda i: (0, 0)),
            ],
            out_specs=pl.BlockSpec((b_tile * S_txt, D_pad), lambda i: (i, 0)),
        ),
        compiler_params=pltpu.CompilerParams(
            dimension_semantics=("parallel",)),
    )(x2, fs_w, fs_b2, ss_w, ss_b2)

    return out2.reshape(B_pad, S_txt, D_pad)[:B, :, :D_txt]


def reference_forward(x, fs_w, fs_b, ss_w, ss_b):
    """Pure-JAX reference with identical math (f32 accumulation) for checking."""
    h = jnp.einsum("bsd,de->bse", x, fs_w, preferred_element_type=jnp.float32)
    h = jnp.maximum(h + fs_b.astype(jnp.float32), 0.0)
    h = h.astype(x.dtype)
    o = jnp.einsum("ts,bse->bte", ss_w, h, preferred_element_type=jnp.float32)
    return o + ss_b.astype(jnp.float32)[None, :, None]


if __name__ == "__main__":
    B = 2
    image_embedder_dims = (16, 32)   # (S_img, D_img)
    text_embedder_dims = (8, 64)     # (S_txt, D_txt)
    S, D = image_embedder_dims
    S_txt, D_txt = text_embedder_dims

    key = jax.random.PRNGKey(0)
    kx, k1, k2, k3, k4 = jax.random.split(key, 5)
    x = jax.random.normal(kx, (B, S, D), jnp.float32)
    # PyTorch nn.Linear-style init; fs_w stored transposed, ss_w in torch layout.
    fs_w = jax.random.uniform(k1, (D, D_txt), jnp.float32, -1.0, 1.0) / jnp.sqrt(jnp.float32(D))
    fs_b = jax.random.uniform(k2, (D_txt,), jnp.float32, -1.0, 1.0) / jnp.sqrt(jnp.float32(D))
    ss_w = jax.random.uniform(k3, (S_txt, S), jnp.float32, -1.0, 1.0) / jnp.sqrt(jnp.float32(S))
    ss_b = jax.random.uniform(k4, (S_txt,), jnp.float32, -1.0, 1.0) / jnp.sqrt(jnp.float32(S))

    # --- f32 path: exact semantics of the PyTorch module ---
    out_f32 = jax.block_until_ready(translator_forward(x, fs_w, fs_b, ss_w, ss_b))
    ref_f32 = jax.block_until_ready(reference_forward(x, fs_w, fs_b, ss_w, ss_b))
    assert out_f32.shape == (B, S_txt, D_txt)
    err = float(jnp.max(jnp.abs(out_f32 - ref_f32)))
    assert jnp.allclose(out_f32, ref_f32, rtol=2e-3, atol=2e-3), f"f32 max abs diff {err}"

    # --- bf16-operand path (v6e/v7x MXU-native); f32 accumulation & output ---
    xb = x.astype(jnp.bfloat16)
    fwb = fs_w.astype(jnp.bfloat16)
    swb = ss_w.astype(jnp.bfloat16)
    out_bf16 = jax.block_until_ready(translator_forward(xb, fwb, fs_b, swb, ss_b))
    ref_bf16 = jax.block_until_ready(reference_forward(xb, fwb, fs_b, swb, ss_b))
    err_b = float(jnp.max(jnp.abs(out_bf16 - ref_bf16)))
    assert jnp.allclose(out_bf16, ref_bf16, rtol=5e-2, atol=5e-2), f"bf16 max abs diff {err_b}"

    print("KERNEL_OK")
</pallas_src>

<mosaic_0001>
module attributes {stable_mosaic.version = 11 : i64} {
  func.func @translator_kernel(%arg0: i32, %arg1: memref<16x32xf32, #tpu.memory_space<vmem>>, %arg2: memref<32x128xf32, #tpu.memory_space<vmem>>, %arg3: memref<1x128xf32, #tpu.memory_space<vmem>>, %arg4: memref<8x16xf32, #tpu.memory_space<vmem>>, %arg5: memref<8x1xf32, #tpu.memory_space<vmem>>, %arg6: memref<8x128xf32, #tpu.memory_space<vmem>>) attributes {dimension_semantics = [#tpu.dimension_semantics<parallel>], iteration_bounds = array<i64: 2>, scalar_prefetch = 0 : i64, scratch_operands = 0 : i64, tpu.core_type = #tpu.core_type<tc>, window_params = [{transform_indices = @transform_0, window_bounds = array<i64: 16, 32>}, {pipeline_mode = #tpu.pipeline_mode<synchronous>, transform_indices = @transform_1, window_bounds = array<i64: 32, 128>}, {pipeline_mode = #tpu.pipeline_mode<synchronous>, transform_indices = @transform_2, window_bounds = array<i64: 1, 128>}, {pipeline_mode = #tpu.pipeline_mode<synchronous>, transform_indices = @transform_3, window_bounds = array<i64: 8, 16>}, {pipeline_mode = #tpu.pipeline_mode<synchronous>, transform_indices = @transform_4, window_bounds = array<i64: 8, 1>}, {transform_indices = @transform_5, window_bounds = array<i64: 8, 128>}]} {
    %c0 = arith.constant 0 : index
    %c0_0 = arith.constant 0 : index
    %0 = vector.load %arg1[%c0, %c0_0] : memref<16x32xf32, #tpu.memory_space<vmem>>, vector<16x32xf32>
    %c0_1 = arith.constant 0 : index
    %c0_2 = arith.constant 0 : index
    %1 = vector.load %arg2[%c0_1, %c0_2] : memref<32x128xf32, #tpu.memory_space<vmem>>, vector<32x128xf32>
    %cst = arith.constant dense<0.000000e+00> : vector<16x128xf32>
    %2 = tpu.matmul %0, %1, %cst {dimension_numbers = #tpu.dot_dimension_numbers<[1], [0], [0], [1], [0, 0, 1, 1], [], []>} : vector<16x32xf32>, vector<32x128xf32>, vector<16x128xf32> -> vector<16x128xf32>
    %c0_3 = arith.constant 0 : index
    %c0_4 = arith.constant 0 : index
    %3 = vector.load %arg3[%c0_3, %c0_4] : memref<1x128xf32, #tpu.memory_space<vmem>>, vector<1x128xf32>
    %4 = vector.broadcast %3 : vector<1x128xf32> to vector<16x128xf32>
    %5 = arith.addf %2, %4 : vector<16x128xf32>
    %cst_5 = arith.constant 0.000000e+00 : f32
    %6 = vector.broadcast %cst_5 : f32 to vector<16x128xf32>
    %7 = arith.maximumf %5, %6 : vector<16x128xf32>
    %c0_6 = arith.constant 0 : index
    %c0_7 = arith.constant 0 : index
    %8 = vector.load %arg4[%c0_6, %c0_7] : memref<8x16xf32, #tpu.memory_space<vmem>>, vector<8x16xf32>
    %c0_8 = arith.constant 0 : index
    %c0_9 = arith.constant 0 : index
    %9 = vector.load %arg5[%c0_8, %c0_9] : memref<8x1xf32, #tpu.memory_space<vmem>>, vector<8x1xf32>
    %cst_10 = arith.constant dense<0.000000e+00> : vector<8x128xf32>
    %10 = tpu.matmul %8, %7, %cst_10 {dimension_numbers = #tpu.dot_dimension_numbers<[1], [0], [0], [1], [0, 0, 1, 1], [], []>} : vector<8x16xf32>, vector<16x128xf32>, vector<8x128xf32> -> vector<8x128xf32>
    %11 = vector.broadcast %9 : vector<8x1xf32> to vector<8x128xf32>
    %12 = arith.addf %10, %11 : vector<8x128xf32>
    %c0_11 = arith.constant 0 : index
    %c0_12 = arith.constant 0 : index
    %13 = vector.load %arg6[%c0_11, %c0_12] : memref<8x128xf32, #tpu.memory_space<vmem>>, vector<8x128xf32>
    tpu.vector_store %arg6[%c0_11, %c0_12], %12 {strides = array<i32>} : memref<8x128xf32, #tpu.memory_space<vmem>>, vector<8x128xf32>,
    return
  }
  func.func @transform_0(%arg0: i32) -> (i32, i32) {
    %c0_i32 = arith.constant 0 : i32
    %c0_i32_0 = arith.constant 0 : i32
    return %arg0, %c0_i32 : i32, i32
  }
  func.func @transform_1(%arg0: i32) -> (i32, i32) {
    %c0_i32 = arith.constant 0 : i32
    %c0_i32_0 = arith.constant 0 : i32
    %c0_i32_1 = arith.constant 0 : i32
    return %c0_i32, %c0_i32_0 : i32, i32
  }
  func.func @transform_2(%arg0: i32) -> (i32, i32) {
    %c0_i32 = arith.constant 0 : i32
    %c0_i32_0 = arith.constant 0 : i32
    %c0_i32_1 = arith.constant 0 : i32
    return %c0_i32, %c0_i32_0 : i32, i32
  }
  func.func @transform_3(%arg0: i32) -> (i32, i32) {
    %c0_i32 = arith.constant 0 : i32
    %c0_i32_0 = arith.constant 0 : i32
    %c0_i32_1 = arith.constant 0 : i32
    return %c0_i32, %c0_i32_0 : i32, i32
  }
  func.func @transform_4(%arg0: i32) -> (i32, i32) {
    %c0_i32 = arith.constant 0 : i32
    %c0_i32_0 = arith.constant 0 : i32
    %c0_i32_1 = arith.constant 0 : i32
    return %c0_i32, %c0_i32_0 : i32, i32
  }
  func.func @transform_5(%arg0: i32) -> (i32, i32) {
    %c0_i32 = arith.constant 0 : i32
    %c0_i32_0 = arith.constant 0 : i32
    return %arg0, %c0_i32 : i32, i32
  }
}

</mosaic_0001>

<llo_original>
// kernel: tpu_custom_call.1
$region0: #{tpu_custom_call.1}
  #allocation0 [shape = 'u32[]', space=smem, size = 0x4, offset = 0x4, fixed_abs, tag = 'smem constant byte address 0x4 - core index']
  #allocation1 [shape = 'u32[144,128]{1,0:T(1,128)}', space=vmem, size = 0x12000, scoped, tag = 'internal scratch']
  %s0 = inlined_call_operand.hbm [shape: f32[32,32], index: 0, kind: input, shape index: {}]
  %s1 = inlined_call_operand.hbm [shape: f32[32,128], index: 1, kind: input, shape index: {}]
  %s2 = inlined_call_operand.vmem [shape: f32[1,128], index: 2, kind: input, shape index: {}]
  %s3 = inlined_call_operand.vmem [shape: f32[8,16], index: 3, kind: input, shape index: {}]
  %s4 = inlined_call_operand.vmem [shape: f32[8,1], index: 4, kind: input, shape index: {}]
  %s5 = inlined_call_operand.hbm [shape: f32[16,128], index: 5, kind: output, shape index: {}]
  %s6 = sld [smem:[#allocation0]]
  $region61: #{tpu_custom_call.1} parent=0
    _
  %s8 = ssub.s32 1, %s6
  %s9 = scalar_select 0, %s8, %s6
  $region1: #{tpu_custom_call.1} parent=0
    #allocation2 [shape = 'u8[16384]{0}', space=vmem, size = 0x4000, scoped, tag = 'input window, operand 0']
    #allocation3 [shape = 's32[2]{0}', space=sflag, size = 0x8, scoped, tag = 'scoped memory for tpu_custom_call.1']
    #allocation4 [shape = 's32[2]{0}', space=sflag, size = 0x8, scoped, tag = 'scoped memory for tpu_custom_call.1']
    #allocation5 [shape = 'u8[16384]{0}', space=vmem, size = 0x4000, scoped, tag = 'input window, operand 1, single buffered']
    #allocation6 [shape = 's32[1]{0}', space=sflag, size = 0x4, scoped, tag = 'scoped memory for tpu_custom_call.1']
    #allocation7 [shape = 'u8[8192]{0}', space=vmem, size = 0x2000, scoped, tag = 'output window, operand 0']
    %10 = vsyncpa [#allocation3], 0
    %s11 = scalar_lea.sflag [#allocation3], 1
    %12 = vsyncpa %s11, 0
    %13 = vsyncpa [#allocation6], 0
    %14 = vsyncpa [#allocation4], 0
    %s15 = scalar_lea.sflag [#allocation4], 1
    %16 = vsyncpa %s15, 0
    loop: start=0, step=1, limit=4
    $region2: #{tpu_custom_call.1} parent=1 // loop_pre_header
      _
    $region3: #{tpu_custom_call.1} parent=1 // loop_header
      %s18 = sphi 0, %s22
      %p19 = scmp.ge.s32.totalorder %s18, 4
      %s28 = sphi 0, %s30
      %s31 = sphi 0, %s28
      %s32 = sphi 0, %s31
      %s48 = sphi 0, %s32
      %s52 = sphi 0, %s52
      %s54 = sphi 0, %s52
      %s55 = sphi 0, %s54
      %s69 = sphi 0, %s55
      %s73 = sphi 0, %s73
      %s75 = sphi 0, %s73
      %s76 = sphi 0, %s75
      %s90 = sphi 0, %s76
      %s94 = sphi 0, %s94
      %s96 = sphi 0, %s94
      %s97 = sphi 0, %s96
      %s111 = sphi 0, %s97
      %s115 = sphi 0, %s115
      %s117 = sphi 0, %s115
      %s118 = sphi 0, %s117
      %s132 = sphi 0, %s118
      %s138 = sphi 0, %s140
      %s141 = sphi 0, %s138
      %s142 = sphi 0, %s141
      %s158 = sphi 0, %s142
    $region4: #{tpu_custom_call.1} parent=1 // loop_header_branch
      %21 = sbr.rel (%p19) target = $region8
    $region5: #{tpu_custom_call.1} parent=1 // loop_body
      %s23 = ssub.s32 %s18, 1
      %s24 = ssub.s32 %s18, 2
      %s25 = sadd.s32 %s18, 1
      %s26 = ssub.s32 %s18, %s25
      %p27 = scmp.eq.s32.totalorder %s26, 0
      %s29 = sadd.s32 %s28, 1
      %s30 = scalar_select %p27, %s28, %s29
      %p33 = pneg %p27
      %p34 = scmp.eq.s32.totalorder %s18, 1
      %p35 = por %p33, %p34
      %p36 = scmp.ne.s32.totalorder %s28, %s31
      %p37 = scmp.eq.s32.totalorder %s18, 0
      %p38 = por %p36, %p37
      %p39 = scmp.ne.s32.totalorder %s28, %s31
      %p40 = scmp.eq.s32.totalorder %s23, 1
      %p41 = por %p39, %p40
      %p42 = scmp.ne.s32.totalorder %s31, %s32
      %p43 = scmp.eq.s32.totalorder %s23, 0
      %p44 = por %p42, %p43
      %p45 = scmp.ne.s32.totalorder %s31, %s32
      %p46 = scmp.eq.s32.totalorder %s24, 1
      %p47 = por %p45, %p46
      %p49 = scmp.ne.s32.totalorder %s32, %s48
      %p50 = scmp.eq.s32.totalorder %s24, 0
      %p51 = por %p49, %p50
      %s53 = sadd.s32 %s52, 1
      %p56 = scmp.eq.s32.totalorder %s18, 1
      %p57 = scmp.ne.s32.totalorder %s52, %s54
      %p58 = scmp.eq.s32.totalorder %s18, 0
      %p59 = por %p57, %p58
      %p60 = scmp.ne.s32.totalorder %s52, %s54
      %p61 = scmp.eq.s32.totalorder %s23, 1
      %p62 = por %p60, %p61
      %p63 = scmp.ne.s32.totalorder %s54, %s55
      %p64 = scmp.eq.s32.totalorder %s23, 0
      %p65 = por %p63, %p64
      %p66 = scmp.ne.s32.totalorder %s54, %s55
      %p67 = scmp.eq.s32.totalorder %s24, 1
      %p68 = por %p66, %p67
      %p70 = scmp.ne.s32.totalorder %s55, %s69
      %p71 = scmp.eq.s32.totalorder %s24, 0
      %p72 = por %p70, %p71
      %s74 = sadd.s32 %s73, 1
      %p77 = scmp.eq.s32.totalorder %s18, 1
      %p78 = scmp.ne.s32.totalorder %s73, %s75
      %p79 = scmp.eq.s32.totalorder %s18, 0
      %p80 = por %p78, %p79
      %p81 = scmp.ne.s32.totalorder %s73, %s75
      %p82 = scmp.eq.s32.totalorder %s23, 1
      %p83 = por %p81, %p82
      %p84 = scmp.ne.s32.totalorder %s75, %s76
      %p85 = scmp.eq.s32.totalorder %s23, 0
      %p86 = por %p84, %p85
      %p87 = scmp.ne.s32.totalorder %s75, %s76
      %p88 = scmp.eq.s32.totalorder %s24, 1
      %p89 = por %p87, %p88
      %p91 = scmp.ne.s32.totalorder %s76, %s90
      %p92 = scmp.eq.s32.totalorder %s24, 0
      %p93 = por %p91, %p92
      %s95 = sadd.s32 %s94, 1
      %p98 = scmp.eq.s32.totalorder %s18, 1
      %p99 = scmp.ne.s32.totalorder %s94, %s96
      %p100 = scmp.eq.s32.totalorder %s18, 0
      %p101 = por %p99, %p100
      %p102 = scmp.ne.s32.totalorder %s94, %s96
      %p103 = scmp.eq.s32.totalorder %s23, 1
      %p104 = por %p102, %p103
      %p105 = scmp.ne.s32.totalorder %s96, %s97
      %p106 = scmp.eq.s32.totalorder %s23, 0
      %p107 = por %p105, %p106
      %p108 = scmp.ne.s32.totalorder %s96, %s97
      %p109 = scmp.eq.s32.totalorder %s24, 1
      %p110 = por %p108, %p109
      %p112 = scmp.ne.s32.totalorder %s97, %s111
      %p113 = scmp.eq.s32.totalorder %s24, 0
      %p114 = por %p112, %p113
      %s116 = sadd.s32 %s115, 1
      %p119 = scmp.eq.s32.totalorder %s18, 1
      %p120 = scmp.ne.s32.totalorder %s115, %s117
      %p121 = scmp.eq.s32.totalorder %s18, 0
      %p122 = por %p120, %p121
      %p123 = scmp.ne.s32.totalorder %s115, %s117
      %p124 = scmp.eq.s32.totalorder %s23, 1
      %p125 = por %p123, %p124
      %p126 = scmp.ne.s32.totalorder %s117, %s118
      %p127 = scmp.eq.s32.totalorder %s23, 0
      %p128 = por %p126, %p127
      %p129 = scmp.ne.s32.totalorder %s117, %s118
      %p130 = scmp.eq.s32.totalorder %s24, 1
      %p131 = por %p129, %p130
      %p133 = scmp.ne.s32.totalorder %s118, %s132
      %p134 = scmp.eq.s32.totalorder %s24, 0
      %p135 = por %p133, %p134
      %s136 = ssub.s32 %s18, %s25
      %p137 = scmp.eq.s32.totalorder %s136, 0
      %s139 = sadd.s32 %s138, 1
      %s140 = scalar_select %p137, %s138, %s139
      %p143 = pneg %p137
      %p144 = scmp.eq.s32.totalorder %s18, 1
      %p145 = por %p143, %p144
      %p146 = scmp.ne.s32.totalorder %s138, %s141
      %p147 = scmp.eq.s32.totalorder %s18, 0
      %p148 = por %p146, %p147
      %p149 = scmp.ne.s32.totalorder %s138, %s141
      %p150 = scmp.eq.s32.totalorder %s23, 1
      %p151 = por %p149, %p150
      %p152 = scmp.ne.s32.totalorder %s141, %s142
      %p153 = scmp.eq.s32.totalorder %s23, 0
      %p154 = por %p152, %p153
      %p155 = scmp.ne.s32.totalorder %s141, %s142
      %p156 = scmp.eq.s32.totalorder %s24, 1
      %p157 = por %p155, %p156
      %p159 = scmp.ne.s32.totalorder %s142, %s158
      %p160 = scmp.eq.s32.totalorder %s24, 0
      %p161 = por %p159, %p160
      %p162 = scmp.le.s32.totalorder 1, %s18
      %p163 = scmp.lt.s32.totalorder %s18, 3
      %p164 = pnand %p162, %p163
      %p165 = pneg %p164
      // Predicated region
      $region9: #{tpu_custom_call.1} parent=5 // pred_check
        _
      $region10: #{tpu_custom_call.1} parent=5 // pred_check_branch
        %167 = sbr.rel (%p164) target = $region12
      $region11: #{tpu_custom_call.1} parent=5 // pred_region
        %s168 = ssub.s32 %s18, 1
        // Predicated region
        $region13: #{tpu_custom_call.1} parent=11 // pred_check
          %p169 = pneg %p65
        $region14: #{tpu_custom_call.1} parent=11 // pred_check_branch
          %171 = sbr.rel (%p169) target = $region16
        $region15: #{tpu_custom_call.1} parent=11 // pred_region
          %s173 = ssub.s32 512, 512
          %174 = vsyncadd [#allocation6], %s173
          %s175 = sshll.u32 [#allocation5], 4
          %s176 = int_to_ptr.vmem [resolvable:$true] %s175
          %181 = dma.hbm_to_vmem [thread:$0]  %s1, 512, %s176, [#allocation6], 128, 128, 8
        $region16: #{tpu_custom_call.1} parent=11 // pred_fallthru
          _
        // Predicated region
        $region17: #{tpu_custom_call.1} parent=11 // pred_check
          %p182 = pneg %p86
        $region18: #{tpu_custom_call.1} parent=11 // pred_check_branch
          %184 = sbr.rel (%p182) target = $region20
        $region19: #{tpu_custom_call.1} parent=11 // pred_region
          _
        $region20: #{tpu_custom_call.1} parent=11 // pred_fallthru
          _
        // Predicated region
        $region21: #{tpu_custom_call.1} parent=11 // pred_check
          %p185 = pneg %p107
        $region22: #{tpu_custom_call.1} parent=11 // pred_check_branch
          %187 = sbr.rel (%p185) target = $region24
        $region23: #{tpu_custom_call.1} parent=11 // pred_region
          _
        $region24: #{tpu_custom_call.1} parent=11 // pred_fallthru
          _
        // Predicated region
        $region25: #{tpu_custom_call.1} parent=11 // pred_check
          %p188 = pneg %p128
        $region26: #{tpu_custom_call.1} parent=11 // pred_check_branch
          %190 = sbr.rel (%p188) target = $region28
        $region27: #{tpu_custom_call.1} parent=11 // pred_region
          _
        $region28: #{tpu_custom_call.1} parent=11 // pred_fallthru
          _
      $region12: #{tpu_custom_call.1} parent=5 // pred_fallthru
        _
      %p191 = scmp.lt.s32.totalorder %s18, 2
      // Predicated region
      $region29: #{tpu_custom_call.1} parent=5 // pred_check
        %p192 = pneg %p191
      $region30: #{tpu_custom_call.1} parent=5 // pred_check_branch
        %194 = sbr.rel (%p192) target = $region32
      $region31: #{tpu_custom_call.1} parent=5 // pred_region
        // Predicated region
        $region33: #{tpu_custom_call.1} parent=31 // pred_check
          %p195 = pneg %p38
        $region34: #{tpu_custom_call.1} parent=31 // pred_check_branch
          %197 = sbr.rel (%p195) target = $region36
        $region35: #{tpu_custom_call.1} parent=31 // pred_region
          %s198 = sand.u32 %s28, 1
          %s199 = scalar_lea.sflag [#allocation3], %s198
          %s200 = sand.u32 %s28, 1
          %s201 = smul.addr %s200, 16
          %s202 = scalar_lea.vmem [#allocation2], %s201
          %s203 = smul.u32 2, %s18
          %s205 = ssub.s32 256, 256
          %206 = vsyncadd %s199, %s205
          %s207 = smul.addr %s203, 128
          %s208 = scalar_lea.hbm %s0, %s207
          %s209 = sshll.u32 %s202, 4
          %s210 = int_to_ptr.vmem [resolvable:$true] %s209
          %215 = dma.hbm_to_vmem [thread:$0]  %s208, 256, %s210, %s199, 128, 128, 8
        $region36: #{tpu_custom_call.1} parent=31 // pred_fallthru
          _
      $region32: #{tpu_custom_call.1} parent=5 // pred_fallthru
        _
      %p216 = scmp.le.s32.totalorder 1, %s18
      %p217 = scmp.lt.s32.totalorder %s18, 3
      %p218 = pnand %p216, %p217
      %p219 = pneg %p218
      // Predicated region
      $region37: #{tpu_custom_call.1} parent=5 // pred_check
        _
      $region38: #{tpu_custom_call.1} parent=5 // pred_check_branch
        %221 = sbr.rel (%p218) target = $region40
      $region39: #{tpu_custom_call.1} parent=5 // pred_region
        %s222 = ssub.s32 %s18, 1
        %s223 = sand.u32 %s31, 1
        %s224 = scalar_lea.sflag [#allocation3], %s223
        %s225 = sand.u32 %s31, 1
        %s226 = smul.addr %s225, 16
        %s227 = scalar_lea.vmem [#allocation2], %s226
        // Predicated region
        $region41: #{tpu_custom_call.1} parent=39 // pred_check
          %p228 = pneg %p44
        $region42: #{tpu_custom_call.1} parent=39 // pred_check_branch
          %230 = sbr.rel (%p228) target = $region44
        $region43: #{tpu_custom_call.1} parent=39 // pred_region
          %231 = dma.done %s224, 256
        $region44: #{tpu_custom_call.1} parent=39 // pred_fallthru
          _
        // Predicated region
        $region45: #{tpu_custom_call.1} parent=39 // pred_check
          %p232 = pneg %p65
        $region46: #{tpu_custom_call.1} parent=39 // pred_check_branch
          %234 = sbr.rel (%p232) target = $region48
        $region47: #{tpu_custom_call.1} parent=39 // pred_region
          %235 = dma.done [#allocation6], 512
        $region48: #{tpu_custom_call.1} parent=39 // pred_fallthru
          _
        %s236 = sand.u32 %s31, 1
        %s237 = scalar_lea.sflag [#allocation3], %s236
        %s238 = sand.u32 %s31, 1
        %s239 = smul.addr %s238, 16
        %s240 = scalar_lea.vmem [#allocation2], %s239
        %p241 = pneg %p44
        %p242 = pneg %p41
        %p243 = pneg %p65
        %p244 = pneg %p62
        %p245 = pneg %p86
        %p246 = pneg %p83
        %p247 = pneg %p107
        %p248 = pneg %p104
        %p249 = pneg %p128
        %p250 = pneg %p125
        %p251 = pneg %p154
        %p252 = pneg %p151
        %s253 = sand.u32 %s141, 1
        %s254 = scalar_lea.sflag [#allocation4], %s253
        %s255 = sand.u32 %s141, 1
        %s256 = smul.addr %s255, 8
        %s257 = scalar_lea.vmem [#allocation7], %s256
        %s258 = smul.u32 2, %s23
        %v259 = vld [vmem:[%s227] sm:$0xff]
        %v260 = vld [vmem:[%s227 + $0x8] sm:$0xff]
        %v261 = vld [vmem:[#allocation5] sm:$0xff]
        %v262 = vld [vmem:[#allocation5 + $0x8] sm:$0xff]
        %v263 = vld [vmem:[#allocation5 + $0x10] sm:$0xff]
        %v264 = vld [vmem:[#allocation5 + $0x18] sm:$0xff]
        %v265 = vld [vmem:[%s2] sm:$0x1]
        %v267 = vlaneseq
        %v268 = vshrl.u32 %v267, 7
        %v269 = vsub.s32 0, %v268
        %v270 = vrot.slane %v265, %v269
        %vm272 = vcmask 261120
        %v274 = vsel %vm272, %v259, 0
        %v277 = vsel %vm272, %v260, 0
        %279 = vmatprep.subr.mxu0 0.0
        %280 = vmatpush1.msra.mxu0 0.0
        %281 = vmatprep.subr.mxu0 0.0
        %282 = vmatpush1.msra.mxu0 0.0
        %283 = vmatprep.subr.mxu0 0.0
        %284 = vmatpush1.msra.mxu0 0.0
        %285 = vmatprep.subr.mxu0 0.0
        %286 = vmatpush1.msra.mxu0 0.0
        %287 = vmatprep.subr.mxu0 0.0
        %288 = vmatpush1.msra.mxu0 0.0
        %289 = vmatprep.subr.mxu0 0.0
        %290 = vmatpush1.msra.mxu0 0.0
        %291 = vmatprep.subr.mxu0 0.0
        %292 = vmatpush1.msra.mxu0 0.0
        %293 = vmatprep.subr.mxu0 0.0
        %294 = vmatpush1.msra.mxu0 0.0
        %295 = vmatprep.subr.mxu0 0.0
        %296 = vmatpush1.msra.mxu0 0.0
        %297 = vmatprep.subr.mxu0 0.0
        %298 = vmatpush1.msra.mxu0 0.0
        %299 = vmatprep.subr.mxu0 0.0
        %300 = vmatpush1.msra.mxu0 0.0
        %301 = vmatprep.subr.mxu0 0.0
        %302 = vmatpush1.msra.mxu0 0.0
        %303 = vmatprep.subr.mxu0 0.0
        %304 = vmatpush1.msra.mxu0 %v264
        %305 = vmatprep.subr.mxu0 0.0
        %306 = vmatpush1.msra.mxu0 %v263
        %307 = vmatprep.subr.mxu0 0.0
        %308 = vmatpush1.msra.mxu0 %v262
        %309 = vmatprep.subr.mxu0 0.0
        %310 = vmatpush1.msra.mxu0 %v261
        %311 = vmatprep.subr.mxu0 0.0
        %312 = vmatpush2.msra.mxu0 0.0
        %313 = vmatprep.subr.mxu0 0.0
        %314 = vmatpush2.msra.mxu0 0.0
        %315 = vmatprep.subr.mxu0 0.0
        %316 = vmatpush2.msra.mxu0 0.0
        %317 = vmatprep.subr.mxu0 0.0
        %318 = vmatpush2.msra.mxu0 0.0
        %319 = vmatprep.subr.mxu0 0.0
        %320 = vmatpush2.msra.mxu0 0.0
        %321 = vmatprep.subr.mxu0 0.0
        %322 = vmatpush2.msra.mxu0 0.0
        %323 = vmatprep.subr.mxu0 0.0
        %324 = vmatpush2.msra.mxu0 0.0
        %325 = vmatprep.subr.mxu0 0.0
        %326 = vmatpush2.msra.mxu0 0.0
        %327 = vmatprep.subr.mxu0 0.0
        %328 = vmatpush2.msra.mxu0 0.0
        %329 = vmatprep.subr.mxu0 0.0
        %330 = vmatpush2.msra.mxu0 0.0
        %331 = vmatprep.subr.mxu0 0.0
        %332 = vmatpush2.msra.mxu0 0.0
        %333 = vmatprep.subr.mxu0 0.0
        %334 = vmatpush2.msra.mxu0 0.0
        %335 = vmatprep.subr.mxu0 0.0
        %336 = vmatpush2.msra.mxu0 0.0
        %337 = vmatprep.subr.mxu0 0.0
        %338 = vmatpush2.msra.mxu0 0.0
        %339 = vmatprep.subr.mxu0 0.0
        %340 = vmatpush2.msra.mxu0 0.0
        %341 = vmatprep.subr.mxu0 0.0
        %342 = vmatpush2.msra.mxu0 0.0
        %343 = vmatprep.mubr.f32.mxu0 0.0
        %344 = vmatmul.mubr.f32.gmra.mxu0 %v274
        %v345 = vpop.f32.mrf.mxu0
        %v346 = vadd.f32 %v270, %v345
        %v347 = vpop.f32.mrf.mxu0
        %348 = vmatprep.mubr.f32.mxu0 0.0
        %349 = vmatmul.mubr.f32.gmra.mxu0 %v277
        %v350 = vpop.f32.mrf.mxu0
        %v351 = vadd.f32 %v270, %v350
        %v352 = vpop.f32.mrf.mxu0
        %353 = vdwg.mxu0
        %v354 = vmax.f32 %v346, 0.0
        %v355 = vmax.f32 %v351, 0.0
        %v356 = vld [vmem:[%s3] sm:$0xff]
        %v357 = vld [vmem:[%s4] sm:$0xff]
        %359 = vset.pattern.permute.xlu0 0
        %360 = vperm.xlu0 %359, %v357
        %v361 = vpop.permute.xlu0 %360
        %vm363 = vcmask 130048
        %v365 = vsel %vm363, %v356, 0
        %367 = vmatprep.subr.mxu0 0.0
        %368 = vmatpush1.msra.mxu0 0.0
        %369 = vmatprep.subr.mxu0 0.0
        %370 = vmatpush1.msra.mxu0 0.0
        %371 = vmatprep.subr.mxu0 0.0
        %372 = vmatpush1.msra.mxu0 0.0
        %373 = vmatprep.subr.mxu0 0.0
        %374 = vmatpush1.msra.mxu0 0.0
        %375 = vmatprep.subr.mxu0 0.0
        %376 = vmatpush1.msra.mxu0 0.0
        %377 = vmatprep.subr.mxu0 0.0
        %378 = vmatpush1.msra.mxu0 0.0
        %379 = vmatprep.subr.mxu0 0.0
        %380 = vmatpush1.msra.mxu0 0.0
        %381 = vmatprep.subr.mxu0 0.0
        %382 = vmatpush1.msra.mxu0 0.0
        %383 = vmatprep.subr.mxu0 0.0
        %384 = vmatpush1.msra.mxu0 0.0
        %385 = vmatprep.subr.mxu0 0.0
        %386 = vmatpush1.msra.mxu0 0.0
        %387 = vmatprep.subr.mxu0 0.0
        %388 = vmatpush1.msra.mxu0 0.0
        %389 = vmatprep.subr.mxu0 0.0
        %390 = vmatpush1.msra.mxu0 0.0
        %391 = vmatprep.subr.mxu0 0.0
        %392 = vmatpush1.msra.mxu0 0.0
        %393 = vmatprep.subr.mxu0 0.0
        %394 = vmatpush1.msra.mxu0 0.0
        %395 = vmatprep.subr.mxu0 0.0
        %396 = vmatpush1.msra.mxu0 %v355
        %397 = vmatprep.subr.mxu0 0.0
        %398 = vmatpush1.msra.mxu0 %v354
        %399 = vmatprep.subr.mxu0 0.0
        %400 = vmatpush2.msra.mxu0 0.0
        %401 = vmatprep.subr.mxu0 0.0
        %402 = vmatpush2.msra.mxu0 0.0
        %403 = vmatprep.subr.mxu0 0.0
        %404 = vmatpush2.msra.mxu0 0.0
        %405 = vmatprep.subr.mxu0 0.0
        %406 = vmatpush2.msra.mxu0 0.0
        %407 = vmatprep.subr.mxu0 0.0
        %408 = vmatpush2.msra.mxu0 0.0
        %409 = vmatprep.subr.mxu0 0.0
        %410 = vmatpush2.msra.mxu0 0.0
        %411 = vmatprep.subr.mxu0 0.0
        %412 = vmatpush2.msra.mxu0 0.0
        %413 = vmatprep.subr.mxu0 0.0
        %414 = vmatpush2.msra.mxu0 0.0
        %415 = vmatprep.subr.mxu0 0.0
        %416 = vmatpush2.msra.mxu0 0.0
        %417 = vmatprep.subr.mxu0 0.0
        %418 = vmatpush2.msra.mxu0 0.0
        %419 = vmatprep.subr.mxu0 0.0
        %420 = vmatpush2.msra.mxu0 0.0
        %421 = vmatprep.subr.mxu0 0.0
        %422 = vmatpush2.msra.mxu0 0.0
        %423 = vmatprep.subr.mxu0 0.0
        %424 = vmatpush2.msra.mxu0 0.0
        %425 = vmatprep.subr.mxu0 0.0
        %426 = vmatpush2.msra.mxu0 0.0
        %427 = vmatprep.subr.mxu0 0.0
        %428 = vmatpush2.msra.mxu0 0.0
        %429 = vmatprep.subr.mxu0 0.0
        %430 = vmatpush2.msra.mxu0 0.0
        %431 = vmatprep.mubr.f32.mxu0 0.0
        %432 = vmatmul.mubr.f32.gmra.mxu0 %v365
        %v433 = vpop.f32.mrf.mxu0
        %v434 = vadd.f32 %v361, %v433
        %v435 = vpop.f32.mrf.mxu0
        %436 = vdwg.mxu0
        %437 = vst [vmem:[%s257] sm:$0xff] %v434
        %s438 = sand.u32 %s141, 1
        %s439 = scalar_lea.sflag [#allocation4], %s438
        %s440 = sand.u32 %s141, 1
        %s441 = smul.addr %s440, 8
        %s442 = scalar_lea.vmem [#allocation7], %s441
        // Predicated region
        $region49: #{tpu_custom_call.1} parent=39 // pred_check
          %p443 = pneg %p151
        $region50: #{tpu_custom_call.1} parent=39 // pred_check_branch
          %445 = sbr.rel (%p443) target = $region52
        $region51: #{tpu_custom_call.1} parent=39 // pred_region
          %s447 = ssub.s32 128, 128
          %448 = vsyncadd %s439, %s447
          %s449 = smul.addr %s23, 128
          %s450 = scalar_lea.hbm %s5, %s449
          %s452 = sshll.u32 %s442, 4
          %s453 = int_to_ptr.vmem [resolvable:$true] %s452
          %455 = dma.vmem_to_hbm [thread:$0]  %s453, 128, %s450, %s439
        $region52: #{tpu_custom_call.1} parent=39 // pred_fallthru
          _
      $region40: #{tpu_custom_call.1} parent=5 // pred_fallthru
        _
      %p456 = scmp.le.s32.totalorder 2, %s18
      // Predicated region
      $region53: #{tpu_custom_call.1} parent=5 // pred_check
        %p457 = pneg %p456
      $region54: #{tpu_custom_call.1} parent=5 // pred_check_branch
        %459 = sbr.rel (%p457) target = $region56
      $region55: #{tpu_custom_call.1} parent=5 // pred_region
        %s460 = ssub.s32 %s18, 2
        // Predicated region
        $region57: #{tpu_custom_call.1} parent=55 // pred_check
          %p461 = pneg %p157
        $region58: #{tpu_custom_call.1} parent=55 // pred_check_branch
          %463 = sbr.rel (%p461) target = $region60
        $region59: #{tpu_custom_call.1} parent=55 // pred_region
          %s464 = sand.u32 %s142, 1
          %s465 = scalar_lea.sflag [#allocation4], %s464
          %s466 = sand.u32 %s142, 1
          %s467 = smul.addr %s466, 8
          %s468 = scalar_lea.vmem [#allocation7], %s467
          %469 = dma.done %s465, 128
        $region60: #{tpu_custom_call.1} parent=55 // pred_fallthru
          _
      $region56: #{tpu_custom_call.1} parent=5 // pred_fallthru
        _
    $region6: #{tpu_custom_call.1} parent=1 // loop_footer
      %s22 = sadd.s32 1, %s18
    $region7: #{tpu_custom_call.1} parent=1 // loop_footer_branch
      %17 = sbr.rel target = $region3
    $region8: #{tpu_custom_call.1} parent=1 // loop_exit
      _
    %470 = vsyncpa [#allocation3], 1
    %s471 = scalar_lea.sflag [#allocation3], 1
    %472 = vsyncpa %s471, 1
    %473 = vsyncpa [#allocation6], 1
    %474 = vsyncpa [#allocation4], 1
    %s475 = scalar_lea.sflag [#allocation4], 1
    %476 = vsyncpa %s475, 1

</llo_original>
